<compile_context>
chip_gen: v7x
topology: tpu7x:2x2x1
jax: 0.10.0
libtpu: 0.0.40
codegen_flags: <defaults>
</compile_context>

<pallas_src>
import functools

import jax
import jax.numpy as jnp
from jax import lax
from jax.experimental import pallas as pl
from jax.experimental.pallas import tpu as pltpu

EPS = 1e-8


def _round_up(n: int, m: int) -> int:
    return ((n + m - 1) // m) * m


def _sublane(dtype) -> int:
    # Rows per vreg for this dtype: 8 (f32), 16 (bf16), 32 (int8/fp8).
    return max(8, 32 // jnp.dtype(dtype).itemsize)


def _sim_kernel(x_ref, y_ref, o_ref, *, inv_temp: float):
    # x_ref: (tm, H), y_ref: (tn, H), o_ref: (tm, tn)
    x = x_ref[...]                      # native dtype straight into the MXU
    y = y_ref[...]

    # Pairwise dot products: contract last dim of both operands (no y.T copy).
    dots = lax.dot_general(
        x, y,
        dimension_numbers=(((1,), (1,)), ((), ())),
        preferred_element_type=jnp.float32,
    )                                   # (tm, tn) f32

    # Squared L2 norms in f32 (keeps precision if inputs are bf16).
    xf = x.astype(jnp.float32)
    yf = y.astype(jnp.float32)
    xsq = jnp.sum(xf * xf, axis=-1, keepdims=True)   # (tm, 1)
    ysq = jnp.sum(yf * yf, axis=-1, keepdims=True)   # (tn, 1)

    # Outer product of squared norms as a rank-1 matmul on the MXU
    # (avoids the (tn,1) -> (1,tn) XLU relayout of an explicit .T).
    nsq = lax.dot_general(
        xsq, ysq,
        dimension_numbers=(((1,), (1,)), ((), ())),
        preferred_element_type=jnp.float32,
    )                                   # (tm, tn) = ||x||^2 * ||y||^2

    # 1 / max(||x||*||y||, eps) == rsqrt(max(||x||^2*||y||^2, eps^2)); fold 1/temp.
    inv = lax.rsqrt(jnp.maximum(nsq, EPS * EPS)) * inv_temp
    o_ref[...] = (dots * inv).astype(o_ref.dtype)


def similarity(x: jax.Array, y: jax.Array, temp: float,
               *, tm_cap: int = 256, tn_cap: int = 128) -> jax.Array:
    """Cosine-similarity matrix divided by temperature.

    x: (B, H), y: (By, H)  ->  (B, By) float32
    Implements the SimCSE broadcast pattern sim(z1.unsqueeze(1), z2.unsqueeze(0)).
    """
    assert x.ndim == 2 and y.ndim == 2 and x.shape[1] == y.shape[1]
    B, H = x.shape
    By = y.shape[0]

    sub = _sublane(x.dtype)
    tm_cap = _round_up(tm_cap, sub)

    # Tile selection: if the dim fits in one block, use the full dim (always a
    # legal block shape; no padding, no extra HBM copy). Otherwise tile with a
    # sublane-multiple tm / lane-dense tn and pad (padded rows give dots=0 and
    # nsq=0 -> finite sim, sliced off below).
    if B <= tm_cap:
        tm, Bp = B, B
    else:
        tm, Bp = tm_cap, _round_up(B, tm_cap)
    if By <= tn_cap:
        tn, Byp = By, By
    else:
        tn, Byp = tn_cap, _round_up(By, tn_cap)

    if Bp != B:
        x = jnp.pad(x, ((0, Bp - B), (0, 0)))
    if Byp != By:
        y = jnp.pad(y, ((0, Byp - By), (0, 0)))

    grid = (Bp // tm, Byp // tn)
    kernel = functools.partial(_sim_kernel, inv_temp=1.0 / float(temp))

    itemsize = jnp.dtype(x.dtype).itemsize
    cost = pl.CostEstimate(
        flops=2 * Bp * Byp * H + 2 * (Bp + Byp) * H + 2 * Bp * Byp,
        transcendentals=Bp * Byp,
        bytes_accessed=itemsize * (Bp * H + Byp * H * grid[0]) + 4 * Bp * Byp,
    )

    out = pl.pallas_call(
        kernel,
        out_shape=jax.ShapeDtypeStruct((Bp, Byp), jnp.float32),
        grid_spec=pltpu.PrefetchScalarGridSpec(
            num_scalar_prefetch=0,
            grid=grid,
            in_specs=[
                pl.BlockSpec((tm, H), lambda i, j: (i, 0)),
                pl.BlockSpec((tn, H), lambda i, j: (j, 0)),
            ],
            out_specs=pl.BlockSpec((tm, tn), lambda i, j: (i, j)),
        ),
        compiler_params=pltpu.CompilerParams(
            dimension_semantics=("parallel", "parallel"),
        ),
        cost_estimate=cost,
    )(x, y)

    if Bp != B or Byp != By:
        out = out[:B, :By]
    return out


def _reference(x, y, temp):
    xf = x.astype(jnp.float32)
    yf = y.astype(jnp.float32)
    xn = jnp.linalg.norm(xf, axis=-1, keepdims=True)
    yn = jnp.linalg.norm(yf, axis=-1, keepdims=True)
    return (xf @ yf.T) / jnp.maximum(xn * yn.T, EPS) / temp


if __name__ == "__main__":
    key = jax.random.PRNGKey(0)
    kx, ky, kx2, ky2, kx3, ky3 = jax.random.split(key, 6)
    temp = 0.05  # module __init__ parameter

    # Primary SimCSE-style check: two small embedding batches (single block).
    B, H = 8, 32
    x = jax.random.normal(kx, (B, H), dtype=jnp.float32)
    y = jax.random.normal(ky, (B, H), dtype=jnp.float32)
    out = jax.block_until_ready(similarity(x, y, temp))
    ref = _reference(x, y, temp)
    assert out.shape == (B, B)
    assert jnp.allclose(out, ref, atol=1e-4, rtol=1e-4), "mismatch vs reference (f32)"

    # Ragged shapes: full-dim blocks, no padding needed.
    B2, By2, H2 = 20, 12, 64
    x2 = jax.random.normal(kx2, (B2, H2), dtype=jnp.float32)
    y2 = jax.random.normal(ky2, (By2, H2), dtype=jnp.float32)
    out2 = jax.block_until_ready(similarity(x2, y2, temp))
    ref2 = _reference(x2, y2, temp)
    assert out2.shape == (B2, By2)
    assert jnp.allclose(out2, ref2, atol=1e-4, rtol=1e-4), "mismatch vs reference (ragged)"

    # Larger batch: exercises the tiled + padded path (grid > 1 on both axes).
    B3, By3, H3 = 384, 300, 128
    x3 = jax.random.normal(kx3, (B3, H3), dtype=jnp.float32)
    y3 = jax.random.normal(ky3, (By3, H3), dtype=jnp.float32)
    out3 = jax.block_until_ready(similarity(x3, y3, temp))
    ref3 = _reference(x3, y3, temp)
    assert out3.shape == (B3, By3)
    assert jnp.allclose(out3, ref3, atol=1e-3, rtol=2e-4), "mismatch vs reference (tiled)"

    print("KERNEL_OK")
</pallas_src>

<mosaic_0001>
module attributes {stable_mosaic.version = 11 : i64} {
  func.func @_sim_kernel(%arg0: i32, %arg1: i32, %arg2: memref<8x32xf32, #tpu.memory_space<vmem>>, %arg3: memref<8x32xf32, #tpu.memory_space<vmem>>, %arg4: memref<8x8xf32, #tpu.memory_space<vmem>>) attributes {dimension_semantics = [#tpu.dimension_semantics<parallel>, #tpu.dimension_semantics<parallel>], iteration_bounds = array<i64: 1, 1>, scalar_prefetch = 0 : i64, scratch_operands = 0 : i64, tpu.core_type = #tpu.core_type<tc>, window_params = [{transform_indices = @transform_0, window_bounds = array<i64: 8, 32>}, {transform_indices = @transform_1, window_bounds = array<i64: 8, 32>}, {transform_indices = @transform_2, window_bounds = array<i64: 8, 8>}]} {
    %c0 = arith.constant 0 : index
    %c0_0 = arith.constant 0 : index
    %0 = vector.load %arg2[%c0, %c0_0] : memref<8x32xf32, #tpu.memory_space<vmem>>, vector<8x32xf32>
    %c0_1 = arith.constant 0 : index
    %c0_2 = arith.constant 0 : index
    %1 = vector.load %arg3[%c0_1, %c0_2] : memref<8x32xf32, #tpu.memory_space<vmem>>, vector<8x32xf32>
    %cst = arith.constant dense<0.000000e+00> : vector<8x8xf32>
    %2 = tpu.matmul %0, %1, %cst {dimension_numbers = #tpu.dot_dimension_numbers<[1], [1], [0], [0], [0, 0, 1, 0], [], []>} : vector<8x32xf32>, vector<8x32xf32>, vector<8x8xf32> -> vector<8x8xf32>
    %3 = arith.mulf %0, %0 : vector<8x32xf32>
    %cst_3 = arith.constant dense<0.000000e+00> : vector<8xf32>
    %4 = vector.multi_reduction <add>, %3, %cst_3 [1] : vector<8x32xf32> to vector<8xf32>
    %5 = vector.shape_cast %4 : vector<8xf32> to vector<8x1xf32>
    %6 = arith.mulf %1, %1 : vector<8x32xf32>
    %cst_4 = arith.constant dense<0.000000e+00> : vector<8xf32>
    %7 = vector.multi_reduction <add>, %6, %cst_4 [1] : vector<8x32xf32> to vector<8xf32>
    %8 = vector.shape_cast %7 : vector<8xf32> to vector<8x1xf32>
    %cst_5 = arith.constant dense<0.000000e+00> : vector<8x8xf32>
    %9 = tpu.matmul %5, %8, %cst_5 {dimension_numbers = #tpu.dot_dimension_numbers<[1], [1], [0], [0], [0, 0, 1, 0], [], []>} : vector<8x1xf32>, vector<8x1xf32>, vector<8x8xf32> -> vector<8x8xf32>
    %cst_6 = arith.constant 1.000000e-16 : f32
    %10 = vector.broadcast %cst_6 : f32 to vector<8x8xf32>
    %11 = arith.maximumf %9, %10 : vector<8x8xf32>
    %12 = math.rsqrt %11 : vector<8x8xf32>
    %cst_7 = arith.constant 2.000000e+01 : f32
    %13 = vector.broadcast %cst_7 : f32 to vector<8x8xf32>
    %14 = arith.mulf %12, %13 : vector<8x8xf32>
    %15 = arith.mulf %2, %14 : vector<8x8xf32>
    %c0_8 = arith.constant 0 : index
    %c0_9 = arith.constant 0 : index
    %16 = vector.load %arg4[%c0_8, %c0_9] : memref<8x8xf32, #tpu.memory_space<vmem>>, vector<8x8xf32>
    tpu.vector_store %arg4[%c0_8, %c0_9], %15 {strides = array<i32>} : memref<8x8xf32, #tpu.memory_space<vmem>>, vector<8x8xf32>,
    return
  }
  func.func @transform_0(%arg0: i32, %arg1: i32) -> (i32, i32) {
    %c0_i32 = arith.constant 0 : i32
    %c0_i32_0 = arith.constant 0 : i32
    return %arg0, %c0_i32 : i32, i32
  }
  func.func @transform_1(%arg0: i32, %arg1: i32) -> (i32, i32) {
    %c0_i32 = arith.constant 0 : i32
    %c0_i32_0 = arith.constant 0 : i32
    return %arg1, %c0_i32 : i32, i32
  }
  func.func @transform_2(%arg0: i32, %arg1: i32) -> (i32, i32) {
    %c0_i32 = arith.constant 0 : i32
    return %arg0, %arg1 : i32, i32
  }
}

</mosaic_0001>

<llo_original>
// kernel: tpu_custom_call.1
$region0: #{tpu_custom_call.1}
  #allocation0 [shape = 'u32[]', space=smem, size = 0x4, offset = 0x4, fixed_abs, tag = 'smem constant byte address 0x4 - core index']
  #allocation1 [shape = 'u32[144,128]{1,0:T(1,128)}', space=vmem, size = 0x12000, scoped, tag = 'internal scratch']
  %s0 = inlined_call_operand.hbm [shape: f32[8,32], index: 0, kind: input, shape index: {}]
  %s1 = inlined_call_operand.hbm [shape: f32[8,32], index: 1, kind: input, shape index: {}]
  %s2 = inlined_call_operand.hbm [shape: f32[8,8], index: 2, kind: output, shape index: {}]
  %s3 = sld [smem:[#allocation0]]
  $region26: #{tpu_custom_call.1} parent=0
    _
  %s5 = ssub.s32 1, %s3
  %s6 = scalar_select 0, %s5, %s3
  $region1: #{tpu_custom_call.1} parent=0
    #allocation2 [shape = 'u8[4096]{0}', space=vmem, size = 0x1000, scoped, tag = 'input window, operand 0, single buffered']
    #allocation3 [shape = 's32[1]{0}', space=sflag, size = 0x4, scoped, tag = 'scoped memory for tpu_custom_call.1']
    #allocation4 [shape = 's32[1]{0}', space=sflag, size = 0x4, scoped, tag = 'scoped memory for tpu_custom_call.1']
    #allocation5 [shape = 'u8[4096]{0}', space=vmem, size = 0x1000, scoped, tag = 'input window, operand 1, single buffered']
    #allocation6 [shape = 's32[1]{0}', space=sflag, size = 0x4, scoped, tag = 'scoped memory for tpu_custom_call.1']
    #allocation7 [shape = 'u8[4096]{0}', space=vmem, size = 0x1000, scoped, tag = 'output window, operand 0, single buffered']
    %7 = vsyncpa [#allocation3], 0
    %8 = vsyncpa [#allocation6], 0
    %9 = vsyncpa [#allocation4], 0
    // Predicated region
    $region2: #{tpu_custom_call.1} parent=1 // pred_check
      _
    $region3: #{tpu_custom_call.1} parent=1 // pred_check_branch
      %11 = sbr.rel (0) target = $region5
    $region4: #{tpu_custom_call.1} parent=1 // pred_region
      %s13 = ssub.s32 128, 128
      %14 = vsyncadd [#allocation3], %s13
      %s16 = sshll.u32 [#allocation2], 4
      %s17 = int_to_ptr.vmem [resolvable:$true] %s16
      %19 = dma.hbm_to_vmem [thread:$0]  %s0, 128, %s17, [#allocation3]
    $region5: #{tpu_custom_call.1} parent=1 // pred_fallthru
      _
    // Predicated region
    $region6: #{tpu_custom_call.1} parent=1 // pred_check
      _
    $region7: #{tpu_custom_call.1} parent=1 // pred_check_branch
      %21 = sbr.rel (0) target = $region9
    $region8: #{tpu_custom_call.1} parent=1 // pred_region
      %s23 = ssub.s32 128, 128
      %24 = vsyncadd [#allocation6], %s23
      %s26 = sshll.u32 [#allocation5], 4
      %s27 = int_to_ptr.vmem [resolvable:$true] %s26
      %29 = dma.hbm_to_vmem [thread:$0]  %s1, 128, %s27, [#allocation6]
    $region9: #{tpu_custom_call.1} parent=1 // pred_fallthru
      _
    // Predicated region
    $region10: #{tpu_custom_call.1} parent=1 // pred_check
      _
    $region11: #{tpu_custom_call.1} parent=1 // pred_check_branch
      %31 = sbr.rel (0) target = $region13
    $region12: #{tpu_custom_call.1} parent=1 // pred_region
      %32 = dma.done [#allocation3], 128
    $region13: #{tpu_custom_call.1} parent=1 // pred_fallthru
      _
    // Predicated region
    $region14: #{tpu_custom_call.1} parent=1 // pred_check
      _
    $region15: #{tpu_custom_call.1} parent=1 // pred_check_branch
      %34 = sbr.rel (0) target = $region17
    $region16: #{tpu_custom_call.1} parent=1 // pred_region
      %35 = dma.done [#allocation6], 128
    $region17: #{tpu_custom_call.1} parent=1 // pred_fallthru
      _
    %v36 = vld [vmem:[#allocation2] sm:$0xff]
    %v37 = vld [vmem:[#allocation5] sm:$0xff]
    %vm38 = vcmask 261120
    %v40 = vsel %vm38, %v36, 0
    %v43 = vsel %vm38, %v37, 0
    %45 = vmatprep.subr.mxu0 0.0
    %46 = vmatpush1.xpose.msra.mxu0 %v43
    %47 = vmatprep.subr.mxu0 0.0
    %48 = vmatpush1.xpose.msra.mxu0 0.0
    %49 = vmatprep.subr.mxu0 0.0
    %50 = vmatpush1.xpose.msra.mxu0 0.0
    %51 = vmatprep.subr.mxu0 0.0
    %52 = vmatpush1.xpose.msra.mxu0 0.0
    %53 = vmatprep.subr.mxu0 0.0
    %54 = vmatpush1.xpose.msra.mxu0 0.0
    %55 = vmatprep.subr.mxu0 0.0
    %56 = vmatpush1.xpose.msra.mxu0 0.0
    %57 = vmatprep.subr.mxu0 0.0
    %58 = vmatpush1.xpose.msra.mxu0 0.0
    %59 = vmatprep.subr.mxu0 0.0
    %60 = vmatpush1.xpose.msra.mxu0 0.0
    %61 = vmatprep.subr.mxu0 0.0
    %62 = vmatpush1.xpose.msra.mxu0 0.0
    %63 = vmatprep.subr.mxu0 0.0
    %64 = vmatpush1.xpose.msra.mxu0 0.0
    %65 = vmatprep.subr.mxu0 0.0
    %66 = vmatpush1.xpose.msra.mxu0 0.0
    %67 = vmatprep.subr.mxu0 0.0
    %68 = vmatpush1.xpose.msra.mxu0 0.0
    %69 = vmatprep.subr.mxu0 0.0
    %70 = vmatpush1.xpose.msra.mxu0 0.0
    %71 = vmatprep.subr.mxu0 0.0
    %72 = vmatpush1.xpose.msra.mxu0 0.0
    %73 = vmatprep.subr.mxu0 0.0
    %74 = vmatpush1.xpose.msra.mxu0 0.0
    %75 = vmatprep.subr.mxu0 0.0
    %76 = vmatpush1.xpose.msra.mxu0 0.0
    %77 = vmatprep.subr.mxu0 0.0
    %78 = vmatpush1.xpose.msra.mxu0 0.0
    %79 = vmatprep.subr.mxu0 0.0
    %80 = vmatpush1.xpose.msra.mxu0 0.0
    %81 = vmatprep.subr.mxu0 0.0
    %82 = vmatpush1.xpose.msra.mxu0 0.0
    %83 = vmatprep.subr.mxu0 0.0
    %84 = vmatpush1.xpose.msra.mxu0 0.0
    %85 = vmatprep.subr.mxu0 0.0
    %86 = vmatpush1.xpose.msra.mxu0 0.0
    %87 = vmatprep.subr.mxu0 0.0
    %88 = vmatpush1.xpose.msra.mxu0 0.0
    %89 = vmatprep.subr.mxu0 0.0
    %90 = vmatpush1.xpose.msra.mxu0 0.0
    %91 = vmatprep.subr.mxu0 0.0
    %92 = vmatpush1.xpose.msra.mxu0 0.0
    %93 = vmatprep.subr.mxu0 0.0
    %94 = vmatpush1.xpose.msra.mxu0 0.0
    %95 = vmatprep.subr.mxu0 0.0
    %96 = vmatpush1.xpose.msra.mxu0 0.0
    %97 = vmatprep.subr.mxu0 0.0
    %98 = vmatpush1.xpose.msra.mxu0 0.0
    %99 = vmatprep.subr.mxu0 0.0
    %100 = vmatpush1.xpose.msra.mxu0 0.0
    %101 = vmatprep.subr.mxu0 0.0
    %102 = vmatpush1.xpose.msra.mxu0 0.0
    %103 = vmatprep.subr.mxu0 0.0
    %104 = vmatpush1.xpose.msra.mxu0 0.0
    %105 = vmatprep.subr.mxu0 0.0
    %106 = vmatpush1.xpose.msra.mxu0 0.0
    %107 = vmatprep.subr.mxu0 0.0
    %108 = vmatpush1.xpose.msra.mxu0 0.0
    %109 = vmatprep.mubr.f32.mxu0 0.0
    %110 = vmatmul.mubr.f32.gmra.mrb[0].mxu0 %v40
    %v111 = vpop.f32.mrb[0].mxu0
    %v112 = vadd.f32 0.0, %v111
    %v113 = vpop.f32.mrb[0].mxu0
    %114 = vdwg.mxu0
    %v115 = vmul.f32 %v36, %v36
    %v116 = vsel %vm38, %v115, 0.0
    %117 = vadd.xlane.f32.xlu0 %v116
    %v118 = vpop.xlane.xlu0 %117
    %v119 = vmul.f32 %v37, %v37
    %v120 = vsel %vm38, %v119, 0.0
    %121 = vadd.xlane.f32.xlu0 %v120
    %v122 = vpop.xlane.xlu0 %121
    %vm123 = vcmask 7168
    %v125 = vsel %vm123, %v118, 0
    %v128 = vsel %vm123, %v122, 0
    %130 = vmatprep.subr.mxu0 0.0
    %131 = vmatpush1.xpose.msra.mxu0 %v128
    %132 = vmatprep.subr.mxu0 0.0
    %133 = vmatpush1.xpose.msra.mxu0 0.0
    %134 = vmatprep.subr.mxu0 0.0
    %135 = vmatpush1.xpose.msra.mxu0 0.0
    %136 = vmatprep.subr.mxu0 0.0
    %137 = vmatpush1.xpose.msra.mxu0 0.0
    %138 = vmatprep.subr.mxu0 0.0
    %139 = vmatpush1.xpose.msra.mxu0 0.0
    %140 = vmatprep.subr.mxu0 0.0
    %141 = vmatpush1.xpose.msra.mxu0 0.0
    %142 = vmatprep.subr.mxu0 0.0
    %143 = vmatpush1.xpose.msra.mxu0 0.0
    %144 = vmatprep.subr.mxu0 0.0
    %145 = vmatpush1.xpose.msra.mxu0 0.0
    %146 = vmatprep.subr.mxu0 0.0
    %147 = vmatpush1.xpose.msra.mxu0 0.0
    %148 = vmatprep.subr.mxu0 0.0
    %149 = vmatpush1.xpose.msra.mxu0 0.0
    %150 = vmatprep.subr.mxu0 0.0
    %151 = vmatpush1.xpose.msra.mxu0 0.0
    %152 = vmatprep.subr.mxu0 0.0
    %153 = vmatpush1.xpose.msra.mxu0 0.0
    %154 = vmatprep.subr.mxu0 0.0
    %155 = vmatpush1.xpose.msra.mxu0 0.0
    %156 = vmatprep.subr.mxu0 0.0
    %157 = vmatpush1.xpose.msra.mxu0 0.0
    %158 = vmatprep.subr.mxu0 0.0
    %159 = vmatpush1.xpose.msra.mxu0 0.0
    %160 = vmatprep.subr.mxu0 0.0
    %161 = vmatpush1.xpose.msra.mxu0 0.0
    %162 = vmatprep.subr.mxu0 0.0
    %163 = vmatpush1.xpose.msra.mxu0 0.0
    %164 = vmatprep.subr.mxu0 0.0
    %165 = vmatpush1.xpose.msra.mxu0 0.0
    %166 = vmatprep.subr.mxu0 0.0
    %167 = vmatpush1.xpose.msra.mxu0 0.0
    %168 = vmatprep.subr.mxu0 0.0
    %169 = vmatpush1.xpose.msra.mxu0 0.0
    %170 = vmatprep.subr.mxu0 0.0
    %171 = vmatpush1.xpose.msra.mxu0 0.0
    %172 = vmatprep.subr.mxu0 0.0
    %173 = vmatpush1.xpose.msra.mxu0 0.0
    %174 = vmatprep.subr.mxu0 0.0
    %175 = vmatpush1.xpose.msra.mxu0 0.0
    %176 = vmatprep.subr.mxu0 0.0
    %177 = vmatpush1.xpose.msra.mxu0 0.0
    %178 = vmatprep.subr.mxu0 0.0
    %179 = vmatpush1.xpose.msra.mxu0 0.0
    %180 = vmatprep.subr.mxu0 0.0
    %181 = vmatpush1.xpose.msra.mxu0 0.0
    %182 = vmatprep.subr.mxu0 0.0
    %183 = vmatpush1.xpose.msra.mxu0 0.0
    %184 = vmatprep.subr.mxu0 0.0
    %185 = vmatpush1.xpose.msra.mxu0 0.0
    %186 = vmatprep.subr.mxu0 0.0
    %187 = vmatpush1.xpose.msra.mxu0 0.0
    %188 = vmatprep.subr.mxu0 0.0
    %189 = vmatpush1.xpose.msra.mxu0 0.0
    %190 = vmatprep.subr.mxu0 0.0
    %191 = vmatpush1.xpose.msra.mxu0 0.0
    %192 = vmatprep.subr.mxu0 0.0
    %193 = vmatpush1.xpose.msra.mxu0 0.0
    %194 = vmatprep.mubr.f32.mxu0 0.0
    %195 = vmatmul.mubr.f32.gmra.mrb[0].mxu0 %v125
    %v196 = vpop.f32.mrb[0].mxu0
    %v197 = vadd.f32 0.0, %v196
    %v198 = vpop.f32.mrb[0].mxu0
    %199 = vdwg.mxu0
    %v200 = vmax.f32 %v197, 1e-16
    %v201 = vrsqrt.pop %v200
    %v202 = vmul.f32 %v201, 20.0
    %v203 = vmul.f32 %v112, %v202
    %vm204 = vcmask 64512
    %205 = vst.msk [vmem:[#allocation7] sm:$0xff] %vm204, %v203
    // Predicated region
    $region18: #{tpu_custom_call.1} parent=1 // pred_check
      _
    $region19: #{tpu_custom_call.1} parent=1 // pred_check_branch
      %207 = sbr.rel (0) target = $region21
    $region20: #{tpu_custom_call.1} parent=1 // pred_region
      %s209 = ssub.s32 128, 128
      %210 = vsyncadd [#allocation4], %s209
      %s212 = sshll.u32 [#allocation7], 4
      %s213 = int_to_ptr.vmem [resolvable:$true] %s212
      %215 = dma.vmem_to_hbm [thread:$0]  %s213, 128, %s2, [#allocation4]
    $region21: #{tpu_custom_call.1} parent=1 // pred_fallthru
      _
    // Predicated region
    $region22: #{tpu_custom_call.1} parent=1 // pred_check
      _
    $region23: #{tpu_custom_call.1} parent=1 // pred_check_branch
      %217 = sbr.rel (0) target = $region25
    $region24: #{tpu_custom_call.1} parent=1 // pred_region
      %218 = dma.done [#allocation4], 128
    $region25: #{tpu_custom_call.1} parent=1 // pred_fallthru
      _
    %219 = vsyncpa [#allocation3], 1
    %220 = vsyncpa [#allocation6], 1
    %221 = vsyncpa [#allocation4], 1

</llo_original>
